<compile_context>
chip_gen: v5e
topology: v5e:2x2
jax: 0.10.0
libtpu: 0.0.40
codegen_flags: <defaults>
</compile_context>

<pallas_src>
import jax
import jax.numpy as jnp
from jax.experimental import pallas as pl
from jax.experimental.pallas import tpu as pltpu

# --- constants from the PyTorch module -------------------------------------
BASE = 10000
HALF_EMBEDDING_DIM = 8
EMBEDDING_DIM = 2 * HALF_EMBEDDING_DIM          # 16
MAX_POS = 1024
# vocab_size in the original script depends on the WMT19 dataset; we pick a
# small deterministic synthetic value (len(vocab) + 1).
VOCAB_SIZE = 128
BLOCK_ROWS = 128                                # positions handled per grid step


# --- parameter construction (glue, plain JAX) --------------------------------
def make_pos_embedding_table():
    """Reproduces PositionalEmbedding.__init__ exactly (note: pos * base**(+2i/d))."""
    pos = jnp.arange(MAX_POS, dtype=jnp.float32).reshape(MAX_POS, 1)
    pos_matrix = jnp.tile(pos, (1, HALF_EMBEDDING_DIM))                       # (max_pos, half)
    index_exponent = 2.0 * jnp.arange(HALF_EMBEDDING_DIM, dtype=jnp.float32) / EMBEDDING_DIM
    index_matrix = jnp.power(float(BASE), index_exponent)                     # (half,)
    index_matrix = jnp.tile(index_matrix.reshape(1, -1), (MAX_POS, 1))        # (max_pos, half)
    angles = pos_matrix * index_matrix
    weights = jnp.zeros((MAX_POS, EMBEDDING_DIM), dtype=jnp.float32)
    weights = weights.at[:, 0::2].set(jnp.sin(angles))
    weights = weights.at[:, 1::2].set(jnp.cos(angles))
    return weights


def make_token_embedding_table(key):
    # nn.Embedding default init: N(0, 1)
    return jax.random.normal(key, (VOCAB_SIZE, EMBEDDING_DIM), dtype=jnp.float32)


# --- Pallas kernel ------------------------------------------------------------
def decoder_embed_kernel(ids_ref, tok_tbl_ref, pos_ref, out_ref):
    # ids_ref:     (BLOCK_ROWS, 1) int32    token ids for this block of positions
    # tok_tbl_ref: (VOCAB_SIZE, EMBEDDING_DIM) f32  full table, VMEM-resident
    # pos_ref:     (BLOCK_ROWS, EMBEDDING_DIM) f32  sinusoidal rows for this block
    # out_ref:     (BLOCK_ROWS, EMBEDDING_DIM) f32
    ids = ids_ref[...]                                                      # (B, 1)
    vocab_iota = jax.lax.broadcasted_iota(jnp.int32, (BLOCK_ROWS, VOCAB_SIZE), 1)
    one_hot = (vocab_iota == ids).astype(jnp.float32)                       # (B, V)
    # Gather = one-hot matmul on the otherwise-idle MXU (V=128 = contraction dim).
    tok = jnp.dot(one_hot, tok_tbl_ref[...],
                  preferred_element_type=jnp.float32)                       # (B, E)
    out_ref[...] = tok + pos_ref[...]


@jax.jit
def _decoder_call(ids_pad2d, tok_emb_table, pos_emb_table):
    padded_seq = ids_pad2d.shape[0]
    num_blocks = padded_seq // BLOCK_ROWS

    grid_spec = pltpu.PrefetchScalarGridSpec(
        num_scalar_prefetch=0,
        grid=(num_blocks,),
        in_specs=[
            # token ids for this block of positions
            pl.BlockSpec((BLOCK_ROWS, 1), lambda i: (i, 0)),
            # full token table, resident in VMEM (constant block index -> one DMA)
            pl.BlockSpec((VOCAB_SIZE, EMBEDDING_DIM), lambda i: (0, 0)),
            # sinusoidal rows for positions [i*B, (i+1)*B)
            pl.BlockSpec((BLOCK_ROWS, EMBEDDING_DIM), lambda i: (i, 0)),
        ],
        out_specs=pl.BlockSpec((BLOCK_ROWS, EMBEDDING_DIM), lambda i: (i, 0)),
    )

    return pl.pallas_call(
        decoder_embed_kernel,
        out_shape=jax.ShapeDtypeStruct((padded_seq, EMBEDDING_DIM), jnp.float32),
        grid_spec=grid_spec,
        compiler_params=pltpu.CompilerParams(dimension_semantics=("parallel",)),
    )(ids_pad2d, tok_emb_table, pos_emb_table)


# --- wrapper ------------------------------------------------------------------
def my_decoder_module(encoded, tok_emb_table, pos_emb_table):
    """encoded: (seq,) int token ids.  Returns (seq, EMBEDDING_DIM) float32."""
    seq = int(encoded.shape[0])
    if seq > MAX_POS:
        raise Exception("size > max_pos")

    # Bucket seq to a multiple of BLOCK_ROWS so compiles are keyed on the bucket,
    # not the raw python length.  Pad ids with 0 (a valid id); tail rows are
    # trimmed after the call.  padded_seq <= MAX_POS since MAX_POS % BLOCK_ROWS == 0.
    padded_seq = ((seq + BLOCK_ROWS - 1) // BLOCK_ROWS) * BLOCK_ROWS
    ids = encoded.astype(jnp.int32)
    ids_pad = jnp.zeros((padded_seq, 1), dtype=jnp.int32).at[:seq, 0].set(ids)

    out_pad = _decoder_call(ids_pad, tok_emb_table, pos_emb_table)
    return out_pad[:seq]


# --- reference (pure JAX) for sanity check ------------------------------------
def reference(encoded, tok_emb_table, pos_emb_table):
    seq = encoded.shape[0]
    return tok_emb_table[encoded] + pos_emb_table[jnp.arange(seq)]


if __name__ == "__main__":
    key = jax.random.PRNGKey(0)
    k_tok, k_ids = jax.random.split(key)

    tok_emb_table = make_token_embedding_table(k_tok)
    pos_emb_table = make_pos_embedding_table()

    SEQ = 8
    # encode() maps characters to ids in [1, vocab_size); simulate with random ids.
    # TODO(synk): dataset loading / vocab construction / encode() are host-side
    # string preprocessing with no Pallas equivalent; replaced by synthetic ids.
    encoded = jax.random.randint(k_ids, (SEQ,), 1, VOCAB_SIZE, dtype=jnp.int32)

    out = my_decoder_module(encoded, tok_emb_table, pos_emb_table)
    out = jax.block_until_ready(out)

    ref = reference(encoded, tok_emb_table, pos_emb_table)
    assert out.shape == (SEQ, EMBEDDING_DIM)
    assert jnp.allclose(out, ref, atol=1e-5, rtol=1e-5), "mismatch vs reference"

    print("KERNEL_OK")
</pallas_src>

<mosaic_0001>
module attributes {stable_mosaic.version = 11 : i64} {
  func.func @decoder_embed_kernel(%arg0: i32, %arg1: memref<128x1xi32, #tpu.memory_space<vmem>>, %arg2: memref<128x16xf32, #tpu.memory_space<vmem>>, %arg3: memref<128x16xf32, #tpu.memory_space<vmem>>, %arg4: memref<128x16xf32, #tpu.memory_space<vmem>>) attributes {dimension_semantics = [#tpu.dimension_semantics<parallel>], iteration_bounds = array<i64: 1>, scalar_prefetch = 0 : i64, scratch_operands = 0 : i64, tpu.core_type = #tpu.core_type<tc>, window_params = [{transform_indices = @transform_0, window_bounds = array<i64: 128, 1>}, {pipeline_mode = #tpu.pipeline_mode<synchronous>, transform_indices = @transform_1, window_bounds = array<i64: 128, 16>}, {transform_indices = @transform_2, window_bounds = array<i64: 128, 16>}, {transform_indices = @transform_3, window_bounds = array<i64: 128, 16>}]} {
    %c0 = arith.constant 0 : index
    %c0_0 = arith.constant 0 : index
    %0 = vector.load %arg1[%c0, %c0_0] : memref<128x1xi32, #tpu.memory_space<vmem>>, vector<128x1xi32>
    %1 = tpu.iota {dimensions = array<i32: 1>} : vector<128x128xi32>
    %2 = vector.broadcast %0 : vector<128x1xi32> to vector<128x128xi32>
    %3 = arith.cmpi eq, %1, %2 : vector<128x128xi32>
    %4 = arith.extui %3 : vector<128x128xi1> to vector<128x128xi32>
    %5 = arith.sitofp %4 : vector<128x128xi32> to vector<128x128xf32>
    %c0_1 = arith.constant 0 : index
    %c0_2 = arith.constant 0 : index
    %6 = vector.load %arg2[%c0_1, %c0_2] : memref<128x16xf32, #tpu.memory_space<vmem>>, vector<128x16xf32>
    %cst = arith.constant dense<0.000000e+00> : vector<128x16xf32>
    %7 = tpu.matmul %5, %6, %cst {dimension_numbers = #tpu.dot_dimension_numbers<[1], [0], [0], [1], [0, 0, 1, 1], [], []>} : vector<128x128xf32>, vector<128x16xf32>, vector<128x16xf32> -> vector<128x16xf32>
    %c0_3 = arith.constant 0 : index
    %c0_4 = arith.constant 0 : index
    %8 = vector.load %arg3[%c0_3, %c0_4] : memref<128x16xf32, #tpu.memory_space<vmem>>, vector<128x16xf32>
    %9 = arith.addf %7, %8 : vector<128x16xf32>
    %c0_5 = arith.constant 0 : index
    %c0_6 = arith.constant 0 : index
    %10 = vector.load %arg4[%c0_5, %c0_6] : memref<128x16xf32, #tpu.memory_space<vmem>>, vector<128x16xf32>
    tpu.vector_store %arg4[%c0_5, %c0_6], %9 {strides = array<i32>} : memref<128x16xf32, #tpu.memory_space<vmem>>, vector<128x16xf32>,
    return
  }
  func.func @transform_0(%arg0: i32) -> (i32, i32) {
    %c0_i32 = arith.constant 0 : i32
    %c0_i32_0 = arith.constant 0 : i32
    return %arg0, %c0_i32 : i32, i32
  }
  func.func @transform_1(%arg0: i32) -> (i32, i32) {
    %c0_i32 = arith.constant 0 : i32
    %c0_i32_0 = arith.constant 0 : i32
    %c0_i32_1 = arith.constant 0 : i32
    return %c0_i32, %c0_i32_0 : i32, i32
  }
  func.func @transform_2(%arg0: i32) -> (i32, i32) {
    %c0_i32 = arith.constant 0 : i32
    %c0_i32_0 = arith.constant 0 : i32
    return %arg0, %c0_i32 : i32, i32
  }
  func.func @transform_3(%arg0: i32) -> (i32, i32) {
    %c0_i32 = arith.constant 0 : i32
    %c0_i32_0 = arith.constant 0 : i32
    return %arg0, %c0_i32 : i32, i32
  }
}

</mosaic_0001>

<llo_original>
// kernel: _decoder_call.1
$region0: #{_decoder_call.1}
  #allocation0 [shape = 'u32[]', space=smem, size = 0x4, offset = 0x4, fixed_abs, tag = 'smem constant byte address 0x4 - core index']
  #allocation1 [shape = 'u32[72,128]{1,0:T(1,128)}', space=vmem, size = 0x9000, scoped, tag = 'internal scratch']
  %s0 = inlined_call_operand.vmem [shape: s32[128,1], index: 0, kind: input, shape index: {}]
  %s1 = inlined_call_operand.vmem [shape: f32[128,16], index: 1, kind: input, shape index: {}]
  %s2 = inlined_call_operand.vmem [shape: f32[1024,16], index: 2, kind: input, shape index: {}]
  %s3 = inlined_call_operand.vmem [shape: f32[128,16], index: 3, kind: output, shape index: {}]
  %s4 = sld [smem:[#allocation0]]
  $region22: #{_decoder_call.1} parent=0
    _
  %s6 = ssub.s32 1, %s4
  %s7 = scalar_select 0, %s6, %s4
  // Predicated region
  $region2: #{_decoder_call.1} parent=0 // pred_check
    _
  $region3: #{_decoder_call.1} parent=0 // pred_check_branch
    %9 = sbr.rel (0) target = $region5
  $region4: #{_decoder_call.1} parent=0 // pred_region
    _
  $region5: #{_decoder_call.1} parent=0 // pred_fallthru
    _
  // Predicated region
  $region6: #{_decoder_call.1} parent=0 // pred_check
    _
  $region7: #{_decoder_call.1} parent=0 // pred_check_branch
    %11 = sbr.rel (0) target = $region9
  $region8: #{_decoder_call.1} parent=0 // pred_region
    _
  $region9: #{_decoder_call.1} parent=0 // pred_fallthru
    _
  // Predicated region
  $region10: #{_decoder_call.1} parent=0 // pred_check
    _
  $region11: #{_decoder_call.1} parent=0 // pred_check_branch
    %13 = sbr.rel (0) target = $region13
  $region12: #{_decoder_call.1} parent=0 // pred_region
    _
  $region13: #{_decoder_call.1} parent=0 // pred_fallthru
    _
  %v14 = vld [vmem:[%s0] sm:$0xff]
  %v15 = vld [vmem:[%s0 + $0x8] sm:$0xff]
  %v16 = vld [vmem:[%s0 + $0x10] sm:$0xff]
  %v17 = vld [vmem:[%s0 + $0x18] sm:$0xff]
  %v18 = vld [vmem:[%s0 + $0x20] sm:$0xff]
  %v19 = vld [vmem:[%s0 + $0x28] sm:$0xff]
  %v20 = vld [vmem:[%s0 + $0x30] sm:$0xff]
  %v21 = vld [vmem:[%s0 + $0x38] sm:$0xff]
  %v22 = vld [vmem:[%s0 + $0x40] sm:$0xff]
  %v23 = vld [vmem:[%s0 + $0x48] sm:$0xff]
  %v24 = vld [vmem:[%s0 + $0x50] sm:$0xff]
  %v25 = vld [vmem:[%s0 + $0x58] sm:$0xff]
  %v26 = vld [vmem:[%s0 + $0x60] sm:$0xff]
  %v27 = vld [vmem:[%s0 + $0x68] sm:$0xff]
  %v28 = vld [vmem:[%s0 + $0x70] sm:$0xff]
  %v29 = vld [vmem:[%s0 + $0x78] sm:$0xff]
  %v30 = vlaneseq
  %v31 = vand.u32 %v30, 127
  %32 = vset.pattern.permute.xlu0 0
  %33 = vperm.xlu0 %32, %v14
  %v34 = vpop.permute.xlu0 %33
  %35 = vset.pattern.permute.xlu0 0
  %36 = vperm.xlu0 %35, %v15
  %v37 = vpop.permute.xlu0 %36
  %38 = vset.pattern.permute.xlu0 0
  %39 = vperm.xlu0 %38, %v16
  %v40 = vpop.permute.xlu0 %39
  %41 = vset.pattern.permute.xlu0 0
  %42 = vperm.xlu0 %41, %v17
  %v43 = vpop.permute.xlu0 %42
  %44 = vset.pattern.permute.xlu0 0
  %45 = vperm.xlu0 %44, %v18
  %v46 = vpop.permute.xlu0 %45
  %47 = vset.pattern.permute.xlu0 0
  %48 = vperm.xlu0 %47, %v19
  %v49 = vpop.permute.xlu0 %48
  %50 = vset.pattern.permute.xlu0 0
  %51 = vperm.xlu0 %50, %v20
  %v52 = vpop.permute.xlu0 %51
  %53 = vset.pattern.permute.xlu0 0
  %54 = vperm.xlu0 %53, %v21
  %v55 = vpop.permute.xlu0 %54
  %56 = vset.pattern.permute.xlu0 0
  %57 = vperm.xlu0 %56, %v22
  %v58 = vpop.permute.xlu0 %57
  %59 = vset.pattern.permute.xlu0 0
  %60 = vperm.xlu0 %59, %v23
  %v61 = vpop.permute.xlu0 %60
  %62 = vset.pattern.permute.xlu0 0
  %63 = vperm.xlu0 %62, %v24
  %v64 = vpop.permute.xlu0 %63
  %65 = vset.pattern.permute.xlu0 0
  %66 = vperm.xlu0 %65, %v25
  %v67 = vpop.permute.xlu0 %66
  %68 = vset.pattern.permute.xlu0 0
  %69 = vperm.xlu0 %68, %v26
  %v70 = vpop.permute.xlu0 %69
  %71 = vset.pattern.permute.xlu0 0
  %72 = vperm.xlu0 %71, %v27
  %v73 = vpop.permute.xlu0 %72
  %74 = vset.pattern.permute.xlu0 0
  %75 = vperm.xlu0 %74, %v28
  %v76 = vpop.permute.xlu0 %75
  %77 = vset.pattern.permute.xlu0 0
  %78 = vperm.xlu0 %77, %v29
  %v79 = vpop.permute.xlu0 %78
  %vm80 = vcmp.eq.s32.totalorder %v31, %v34
  %vm81 = vcmp.eq.s32.totalorder %v31, %v37
  %vm82 = vcmp.eq.s32.totalorder %v31, %v40
  %vm83 = vcmp.eq.s32.totalorder %v31, %v43
  %vm84 = vcmp.eq.s32.totalorder %v31, %v46
  %vm85 = vcmp.eq.s32.totalorder %v31, %v49
  %vm86 = vcmp.eq.s32.totalorder %v31, %v52
  %vm87 = vcmp.eq.s32.totalorder %v31, %v55
  %vm88 = vcmp.eq.s32.totalorder %v31, %v58
  %vm89 = vcmp.eq.s32.totalorder %v31, %v61
  %vm90 = vcmp.eq.s32.totalorder %v31, %v64
  %vm91 = vcmp.eq.s32.totalorder %v31, %v67
  %vm92 = vcmp.eq.s32.totalorder %v31, %v70
  %vm93 = vcmp.eq.s32.totalorder %v31, %v73
  %vm94 = vcmp.eq.s32.totalorder %v31, %v76
  %vm95 = vcmp.eq.s32.totalorder %v31, %v79
  %v96 = vsel %vm80, 1, 0
  %v97 = vsel %vm81, 1, 0
  %v98 = vsel %vm82, 1, 0
  %v99 = vsel %vm83, 1, 0
  %v100 = vsel %vm84, 1, 0
  %v101 = vsel %vm85, 1, 0
  %v102 = vsel %vm86, 1, 0
  %v103 = vsel %vm87, 1, 0
  %v104 = vsel %vm88, 1, 0
  %v105 = vsel %vm89, 1, 0
  %v106 = vsel %vm90, 1, 0
  %v107 = vsel %vm91, 1, 0
  %v108 = vsel %vm92, 1, 0
  %v109 = vsel %vm93, 1, 0
  %v110 = vsel %vm94, 1, 0
  %v111 = vsel %vm95, 1, 0
  %v112 = vcvt.s32.f32 %v96
  %v113 = vcvt.s32.f32 %v97
  %v114 = vcvt.s32.f32 %v98
  %v115 = vcvt.s32.f32 %v99
  %v116 = vcvt.s32.f32 %v100
  %v117 = vcvt.s32.f32 %v101
  %v118 = vcvt.s32.f32 %v102
  %v119 = vcvt.s32.f32 %v103
  %v120 = vcvt.s32.f32 %v104
  %v121 = vcvt.s32.f32 %v105
  %v122 = vcvt.s32.f32 %v106
  %v123 = vcvt.s32.f32 %v107
  %v124 = vcvt.s32.f32 %v108
  %v125 = vcvt.s32.f32 %v109
  %v126 = vcvt.s32.f32 %v110
  %v127 = vcvt.s32.f32 %v111
  %v128 = vld [vmem:[%s1] sm:$0xff]
  %v129 = vld [vmem:[%s1 + $0x8] sm:$0xff]
  %v130 = vld [vmem:[%s1 + $0x10] sm:$0xff]
  %v131 = vld [vmem:[%s1 + $0x18] sm:$0xff]
  %v132 = vld [vmem:[%s1 + $0x20] sm:$0xff]
  %v133 = vld [vmem:[%s1 + $0x28] sm:$0xff]
  %v134 = vld [vmem:[%s1 + $0x30] sm:$0xff]
  %v135 = vld [vmem:[%s1 + $0x38] sm:$0xff]
  %v136 = vld [vmem:[%s1 + $0x40] sm:$0xff]
  %v137 = vld [vmem:[%s1 + $0x48] sm:$0xff]
  %v138 = vld [vmem:[%s1 + $0x50] sm:$0xff]
  %v139 = vld [vmem:[%s1 + $0x58] sm:$0xff]
  %v140 = vld [vmem:[%s1 + $0x60] sm:$0xff]
  %v141 = vld [vmem:[%s1 + $0x68] sm:$0xff]
  %v142 = vld [vmem:[%s1 + $0x70] sm:$0xff]
  %v143 = vld [vmem:[%s1 + $0x78] sm:$0xff]
  %v144 = vld [vmem:[%s2] sm:$0xff]
  %v145 = vld [vmem:[%s2 + $0x8] sm:$0xff]
  %v146 = vld [vmem:[%s2 + $0x10] sm:$0xff]
  %v147 = vld [vmem:[%s2 + $0x18] sm:$0xff]
  %v148 = vld [vmem:[%s2 + $0x20] sm:$0xff]
  %v149 = vld [vmem:[%s2 + $0x28] sm:$0xff]
  %v150 = vld [vmem:[%s2 + $0x30] sm:$0xff]
  %v151 = vld [vmem:[%s2 + $0x38] sm:$0xff]
  %v152 = vld [vmem:[%s2 + $0x40] sm:$0xff]
  %v153 = vld [vmem:[%s2 + $0x48] sm:$0xff]
  %v154 = vld [vmem:[%s2 + $0x50] sm:$0xff]
  %v155 = vld [vmem:[%s2 + $0x58] sm:$0xff]
  %v156 = vld [vmem:[%s2 + $0x60] sm:$0xff]
  %v157 = vld [vmem:[%s2 + $0x68] sm:$0xff]
  %v158 = vld [vmem:[%s2 + $0x70] sm:$0xff]
  %v159 = vld [vmem:[%s2 + $0x78] sm:$0xff]
  %160 = vmatpush.msra.mxu0 %v143
  %161 = vmatpush.msra.mxu0 %v142
  %162 = vmatpush.msra.mxu0 %v141
  %163 = vmatpush.msra.mxu0 %v140
  %164 = vmatpush.msra.mxu0 %v139
  %165 = vmatpush.msra.mxu0 %v138
  %166 = vmatpush.msra.mxu0 %v137
  %167 = vmatpush.msra.mxu0 %v136
  %168 = vmatpush.msra.mxu0 %v135
  %169 = vmatpush.msra.mxu0 %v134
  %170 = vmatpush.msra.mxu0 %v133
  %171 = vmatpush.msra.mxu0 %v132
  %172 = vmatpush.msra.mxu0 %v131
  %173 = vmatpush.msra.mxu0 %v130
  %174 = vmatpush.msra.mxu0 %v129
  %175 = vmatpush.msra.mxu0 %v128
  %176 = vmatmul.f32.gmra.mxu0 %v112
  %v177 = vpop.f32.mrf.mxu0
  %v178 = vadd.f32 %v144, %v177
  %179 = vmatmul.f32.gmra.mxu0 %v113
  %v180 = vpop.f32.mrf.mxu0
  %v181 = vadd.f32 %v145, %v180
  %182 = vmatmul.f32.gmra.mxu0 %v114
  %v183 = vpop.f32.mrf.mxu0
  %v184 = vadd.f32 %v146, %v183
  %185 = vmatmul.f32.gmra.mxu0 %v115
  %v186 = vpop.f32.mrf.mxu0
  %v187 = vadd.f32 %v147, %v186
  %188 = vmatmul.f32.gmra.mxu0 %v116
  %v189 = vpop.f32.mrf.mxu0
  %v190 = vadd.f32 %v148, %v189
  %191 = vmatmul.f32.gmra.mxu0 %v117
  %v192 = vpop.f32.mrf.mxu0
  %v193 = vadd.f32 %v149, %v192
  %194 = vmatmul.f32.gmra.mxu0 %v118
  %v195 = vpop.f32.mrf.mxu0
  %v196 = vadd.f32 %v150, %v195
  %197 = vmatmul.f32.gmra.mxu0 %v119
  %v198 = vpop.f32.mrf.mxu0
  %v199 = vadd.f32 %v151, %v198
  %200 = vmatmul.f32.gmra.mxu0 %v120
  %v201 = vpop.f32.mrf.mxu0
  %v202 = vadd.f32 %v152, %v201
  %203 = vmatmul.f32.gmra.mxu0 %v121
  %v204 = vpop.f32.mrf.mxu0
  %v205 = vadd.f32 %v153, %v204
  %206 = vmatmul.f32.gmra.mxu0 %v122
  %v207 = vpop.f32.mrf.mxu0
  %v208 = vadd.f32 %v154, %v207
  %209 = vmatmul.f32.gmra.mxu0 %v123
  %v210 = vpop.f32.mrf.mxu0
  %v211 = vadd.f32 %v155, %v210
  %212 = vmatmul.f32.gmra.mxu0 %v124
  %v213 = vpop.f32.mrf.mxu0
  %v214 = vadd.f32 %v156, %v213
  %215 = vmatmul.f32.gmra.mxu0 %v125
  %v216 = vpop.f32.mrf.mxu0
  %v217 = vadd.f32 %v157, %v216
  %218 = vmatmul.f32.gmra.mxu0 %v126
  %v219 = vpop.f32.mrf.mxu0
  %v220 = vadd.f32 %v158, %v219
  %221 = vmatmul.f32.gmra.mxu0 %v127
  %v222 = vpop.f32.mrf.mxu0
  %v223 = vadd.f32 %v159, %v222
  %224 = vdwg.mxu0
  %vm225 = vcmask 130048
  %226 = vst.msk [vmem:[%s3] sm:$0xff] %vm225, %v178
  %227 = vst.msk [vmem:[%s3 + $0x8] sm:$0xff] %vm225, %v181
  %228 = vst.msk [vmem:[%s3 + $0x10] sm:$0xff] %vm225, %v184
  %229 = vst.msk [vmem:[%s3 + $0x18] sm:$0xff] %vm225, %v187
  %230 = vst.msk [vmem:[%s3 + $0x20] sm:$0xff] %vm225, %v190
  %231 = vst.msk [vmem:[%s3 + $0x28] sm:$0xff] %vm225, %v193
  %232 = vst.msk [vmem:[%s3 + $0x30] sm:$0xff] %vm225, %v196
  %233 = vst.msk [vmem:[%s3 + $0x38] sm:$0xff] %vm225, %v199
  %234 = vst.msk [vmem:[%s3 + $0x40] sm:$0xff] %vm225, %v202
  %235 = vst.msk [vmem:[%s3 + $0x48] sm:$0xff] %vm225, %v205
  %236 = vst.msk [vmem:[%s3 + $0x50] sm:$0xff] %vm225, %v208
  %237 = vst.msk [vmem:[%s3 + $0x58] sm:$0xff] %vm225, %v211
  %238 = vst.msk [vmem:[%s3 + $0x60] sm:$0xff] %vm225, %v214
  %239 = vst.msk [vmem:[%s3 + $0x68] sm:$0xff] %vm225, %v217
  %240 = vst.msk [vmem:[%s3 + $0x70] sm:$0xff] %vm225, %v220
  %241 = vst.msk [vmem:[%s3 + $0x78] sm:$0xff] %vm225, %v223
  // Predicated region
  $region14: #{_decoder_call.1} parent=0 // pred_check
    _
  $region15: #{_decoder_call.1} parent=0 // pred_check_branch
    %243 = sbr.rel (0) target = $region17
  $region16: #{_decoder_call.1} parent=0 // pred_region
    _
  $region17: #{_decoder_call.1} parent=0 // pred_fallthru
    _
  // Predicated region
  $region18: #{_decoder_call.1} parent=0 // pred_check
    _
  $region19: #{_decoder_call.1} parent=0 // pred_check_branch
    %245 = sbr.rel (0) target = $region21
  $region20: #{_decoder_call.1} parent=0 // pred_region
    _
  $region21: #{_decoder_call.1} parent=0 // pred_fallthru
    _

</llo_original>
